<compile_context>
chip_gen: v7x
topology: tpu7x:2x2x1
jax: 0.10.0
libtpu: 0.0.40
codegen_flags: <defaults>
</compile_context>

<pallas_src>
import functools

import jax
import jax.numpy as jnp
from jax.experimental import pallas as pl
from jax.experimental.pallas import tpu as pltpu

LANE = 128
SUBLANE = 8


def _round_up(x, m):
    return ((x + m - 1) // m) * m


def dqn_kernel(x_ref, w1_ref, b1_ref, w2_ref, b2_ref, w3_ref, b3_ref, o_ref):
    # Layer 1: Linear(state_pad -> 256) + ReLU   (bf16 operands, f32 accumulate)
    h1 = jnp.dot(x_ref[...], w1_ref[...], preferred_element_type=jnp.float32)
    h1 = jnp.maximum(h1 + b1_ref[...], 0.0)  # f32 epilogue (bias is (1,256))

    # Layer 2: Linear(256 -> 128) + ReLU
    h2 = jnp.dot(h1.astype(w2_ref.dtype), w2_ref[...],
                 preferred_element_type=jnp.float32)
    h2 = jnp.maximum(h2 + b2_ref[...], 0.0)

    # Layer 3: Linear(128 -> action_pad), no activation. Padded w3/b3 columns
    # are zero, so the extra lanes carry exact zeros -> lane-dense unmasked vst.
    out = jnp.dot(h2.astype(w3_ref.dtype), w3_ref[...],
                  preferred_element_type=jnp.float32)
    o_ref[...] = (out + b3_ref[...]).astype(o_ref.dtype)


@functools.partial(jax.jit, static_argnames=("tm", "compute_dtype"))
def dqn_forward(x, w1, b1, w2, b2, w3, b3, *, tm=256,
                compute_dtype=jnp.bfloat16):
    """y = relu(x@w1+b1); y = relu(y@w2+b2); return y@w3+b3  (weights are (in,out))."""
    B, state_dim = x.shape
    H1 = w1.shape[1]            # 256
    H2 = w2.shape[1]            # 128
    action_dim = w3.shape[1]

    # Lane/sublane-aligned padded sizes.
    k_pad = _round_up(state_dim, LANE)
    a_pad = _round_up(action_dim, LANE)
    tm_eff = min(tm, _round_up(B, SUBLANE))     # don't over-pad tiny batches
    b_pad = _round_up(B, tm_eff)

    f32 = jnp.float32
    # Pad + cast operands in the wrapper (zero-fill keeps results exact).
    x_p = jnp.zeros((b_pad, k_pad), compute_dtype)
    x_p = x_p.at[:B, :state_dim].set(x.astype(compute_dtype))
    w1_p = jnp.zeros((k_pad, H1), compute_dtype)
    w1_p = w1_p.at[:state_dim, :].set(w1.astype(compute_dtype))
    w2_c = w2.astype(compute_dtype)
    w3_p = jnp.zeros((H2, a_pad), compute_dtype)
    w3_p = w3_p.at[:, :action_dim].set(w3.astype(compute_dtype))
    b1_p = b1.reshape(1, H1).astype(f32)
    b2_p = b2.reshape(1, H2).astype(f32)
    b3_p = jnp.zeros((1, a_pad), f32)
    b3_p = b3_p.at[:, :action_dim].set(b3.reshape(1, action_dim).astype(f32))

    grid = (b_pad // tm_eff,)

    # x / out tile over batch; weights & biases are resident (constant index_map).
    resident = lambda shape: pl.BlockSpec(shape, lambda i: (0,) * len(shape))
    out = pl.pallas_call(
        dqn_kernel,
        out_shape=jax.ShapeDtypeStruct((b_pad, a_pad), f32),
        grid=grid,
        in_specs=[
            pl.BlockSpec((tm_eff, k_pad), lambda i: (i, 0)),   # x tile
            resident((k_pad, H1)),                             # w1
            resident((1, H1)),                                 # b1
            resident((H1, H2)),                                # w2
            resident((1, H2)),                                 # b2
            resident((H2, a_pad)),                             # w3
            resident((1, a_pad)),                              # b3
        ],
        out_specs=pl.BlockSpec((tm_eff, a_pad), lambda i: (i, 0)),
        compiler_params=pltpu.CompilerParams(
            dimension_semantics=("parallel",),                 # v7x: split over 2 TCs
        ),
    )(x_p, w1_p, b1_p, w2_c, b2_p, w3_p, b3_p)

    return out[:B, :action_dim]


def init_params(key, state_dim, action_dim):
    # Deterministic synthetic init (PyTorch-style uniform fan-in bounds).
    dims = [(state_dim, 256), (256, 128), (128, action_dim)]
    params = []
    for fan_in, fan_out in dims:
        kw, kb, key = jax.random.split(key, 3)
        bound = 1.0 / jnp.sqrt(fan_in)
        w = jax.random.uniform(kw, (fan_in, fan_out), jnp.float32, -bound, bound)
        b = jax.random.uniform(kb, (1, fan_out), jnp.float32, -bound, bound)
        params += [w, b]
    return params


def reference_forward_f32(x, w1, b1, w2, b2, w3, b3):
    h1 = jnp.maximum(x @ w1 + b1, 0.0)
    h2 = jnp.maximum(h1 @ w2 + b2, 0.0)
    return h2 @ w3 + b3


def reference_forward_bf16(x, w1, b1, w2, b2, w3, b3):
    cd = jnp.bfloat16
    h1 = jnp.dot(x.astype(cd), w1.astype(cd), preferred_element_type=jnp.float32)
    h1 = jnp.maximum(h1 + b1, 0.0)
    h2 = jnp.dot(h1.astype(cd), w2.astype(cd), preferred_element_type=jnp.float32)
    h2 = jnp.maximum(h2 + b2, 0.0)
    out = jnp.dot(h2.astype(cd), w3.astype(cd), preferred_element_type=jnp.float32)
    return out + b3


if __name__ == "__main__":
    state_dim, action_dim, batch = 8, 4, 2

    key = jax.random.PRNGKey(0)
    kx, kp = jax.random.split(key)
    x = jax.random.normal(kx, (batch, state_dim), jnp.float32)
    w1, b1, w2, b2, w3, b3 = init_params(kp, state_dim, action_dim)

    out = dqn_forward(x, w1, b1, w2, b2, w3, b3)
    out = jax.block_until_ready(out)
    assert out.shape == (batch, action_dim)

    # Match against a bf16-operand / f32-accumulate reference (same numerics).
    ref_bf16 = reference_forward_bf16(x, w1, b1, w2, b2, w3, b3)
    assert jnp.allclose(out, ref_bf16, atol=1e-3, rtol=1e-2)

    # Sanity vs. full-f32 reference (bf16 operand rounding bounded by ~1%).
    ref_f32 = reference_forward_f32(x, w1, b1, w2, b2, w3, b3)
    assert jnp.allclose(out, ref_f32, atol=3e-2, rtol=3e-2)

    print("KERNEL_OK")
</pallas_src>

<mosaic_0001>
module attributes {stable_mosaic.version = 11 : i64} {
  func.func @dqn_kernel(%arg0: i32, %arg1: memref<8x128xbf16, #tpu.memory_space<vmem>>, %arg2: memref<128x256xbf16, #tpu.memory_space<vmem>>, %arg3: memref<1x256xf32, #tpu.memory_space<vmem>>, %arg4: memref<256x128xbf16, #tpu.memory_space<vmem>>, %arg5: memref<1x128xf32, #tpu.memory_space<vmem>>, %arg6: memref<128x128xbf16, #tpu.memory_space<vmem>>, %arg7: memref<1x128xf32, #tpu.memory_space<vmem>>, %arg8: memref<8x128xf32, #tpu.memory_space<vmem>>) attributes {dimension_semantics = [#tpu.dimension_semantics<parallel>], iteration_bounds = array<i64: 1>, scalar_prefetch = 0 : i64, scratch_operands = 0 : i64, tpu.core_type = #tpu.core_type<tc>, window_params = [{transform_indices = @transform_0, window_bounds = array<i64: 8, 128>}, {pipeline_mode = #tpu.pipeline_mode<synchronous>, transform_indices = @transform_1, window_bounds = array<i64: 128, 256>}, {pipeline_mode = #tpu.pipeline_mode<synchronous>, transform_indices = @transform_2, window_bounds = array<i64: 1, 256>}, {pipeline_mode = #tpu.pipeline_mode<synchronous>, transform_indices = @transform_3, window_bounds = array<i64: 256, 128>}, {pipeline_mode = #tpu.pipeline_mode<synchronous>, transform_indices = @transform_4, window_bounds = array<i64: 1, 128>}, {pipeline_mode = #tpu.pipeline_mode<synchronous>, transform_indices = @transform_5, window_bounds = array<i64: 128, 128>}, {pipeline_mode = #tpu.pipeline_mode<synchronous>, transform_indices = @transform_6, window_bounds = array<i64: 1, 128>}, {transform_indices = @transform_7, window_bounds = array<i64: 8, 128>}]} {
    %c0 = arith.constant 0 : index
    %c0_0 = arith.constant 0 : index
    %0 = vector.load %arg1[%c0, %c0_0] : memref<8x128xbf16, #tpu.memory_space<vmem>>, vector<8x128xbf16>
    %c0_1 = arith.constant 0 : index
    %c0_2 = arith.constant 0 : index
    %1 = vector.load %arg2[%c0_1, %c0_2] : memref<128x256xbf16, #tpu.memory_space<vmem>>, vector<128x256xbf16>
    %cst = arith.constant dense<0.000000e+00> : vector<8x256xf32>
    %2 = tpu.matmul %0, %1, %cst {dimension_numbers = #tpu.dot_dimension_numbers<[1], [0], [0], [1], [0, 0, 1, 1], [], []>} : vector<8x128xbf16>, vector<128x256xbf16>, vector<8x256xf32> -> vector<8x256xf32>
    %c0_3 = arith.constant 0 : index
    %c0_4 = arith.constant 0 : index
    %3 = vector.load %arg3[%c0_3, %c0_4] : memref<1x256xf32, #tpu.memory_space<vmem>>, vector<1x256xf32>
    %4 = vector.broadcast %3 : vector<1x256xf32> to vector<8x256xf32>
    %5 = arith.addf %2, %4 : vector<8x256xf32>
    %cst_5 = arith.constant 0.000000e+00 : f32
    %6 = vector.broadcast %cst_5 : f32 to vector<8x256xf32>
    %7 = arith.maximumf %5, %6 : vector<8x256xf32>
    %8 = arith.truncf %7 : vector<8x256xf32> to vector<8x256xbf16>
    %c0_6 = arith.constant 0 : index
    %c0_7 = arith.constant 0 : index
    %9 = vector.load %arg4[%c0_6, %c0_7] : memref<256x128xbf16, #tpu.memory_space<vmem>>, vector<256x128xbf16>
    %cst_8 = arith.constant dense<0.000000e+00> : vector<8x128xf32>
    %10 = tpu.matmul %8, %9, %cst_8 {dimension_numbers = #tpu.dot_dimension_numbers<[1], [0], [0], [1], [0, 0, 1, 1], [], []>} : vector<8x256xbf16>, vector<256x128xbf16>, vector<8x128xf32> -> vector<8x128xf32>
    %c0_9 = arith.constant 0 : index
    %c0_10 = arith.constant 0 : index
    %11 = vector.load %arg5[%c0_9, %c0_10] : memref<1x128xf32, #tpu.memory_space<vmem>>, vector<1x128xf32>
    %12 = vector.broadcast %11 : vector<1x128xf32> to vector<8x128xf32>
    %13 = arith.addf %10, %12 : vector<8x128xf32>
    %cst_11 = arith.constant 0.000000e+00 : f32
    %14 = vector.broadcast %cst_11 : f32 to vector<8x128xf32>
    %15 = arith.maximumf %13, %14 : vector<8x128xf32>
    %16 = arith.truncf %15 : vector<8x128xf32> to vector<8x128xbf16>
    %c0_12 = arith.constant 0 : index
    %c0_13 = arith.constant 0 : index
    %17 = vector.load %arg6[%c0_12, %c0_13] : memref<128x128xbf16, #tpu.memory_space<vmem>>, vector<128x128xbf16>
    %cst_14 = arith.constant dense<0.000000e+00> : vector<8x128xf32>
    %18 = tpu.matmul %16, %17, %cst_14 {dimension_numbers = #tpu.dot_dimension_numbers<[1], [0], [0], [1], [0, 0, 1, 1], [], []>} : vector<8x128xbf16>, vector<128x128xbf16>, vector<8x128xf32> -> vector<8x128xf32>
    %c0_15 = arith.constant 0 : index
    %c0_16 = arith.constant 0 : index
    %19 = vector.load %arg7[%c0_15, %c0_16] : memref<1x128xf32, #tpu.memory_space<vmem>>, vector<1x128xf32>
    %20 = vector.broadcast %19 : vector<1x128xf32> to vector<8x128xf32>
    %21 = arith.addf %18, %20 : vector<8x128xf32>
    %c0_17 = arith.constant 0 : index
    %c0_18 = arith.constant 0 : index
    %22 = vector.load %arg8[%c0_17, %c0_18] : memref<8x128xf32, #tpu.memory_space<vmem>>, vector<8x128xf32>
    tpu.vector_store %arg8[%c0_17, %c0_18], %21 {strides = array<i32>} : memref<8x128xf32, #tpu.memory_space<vmem>>, vector<8x128xf32>,
    return
  }
  func.func @transform_0(%arg0: i32) -> (i32, i32) {
    %c0_i32 = arith.constant 0 : i32
    %c0_i32_0 = arith.constant 0 : i32
    return %arg0, %c0_i32 : i32, i32
  }
  func.func @transform_1(%arg0: i32) -> (i32, i32) {
    %c0_i32 = arith.constant 0 : i32
    %c0_i32_0 = arith.constant 0 : i32
    %c0_i32_1 = arith.constant 0 : i32
    return %c0_i32, %c0_i32_0 : i32, i32
  }
  func.func @transform_2(%arg0: i32) -> (i32, i32) {
    %c0_i32 = arith.constant 0 : i32
    %c0_i32_0 = arith.constant 0 : i32
    %c0_i32_1 = arith.constant 0 : i32
    return %c0_i32, %c0_i32_0 : i32, i32
  }
  func.func @transform_3(%arg0: i32) -> (i32, i32) {
    %c0_i32 = arith.constant 0 : i32
    %c0_i32_0 = arith.constant 0 : i32
    %c0_i32_1 = arith.constant 0 : i32
    return %c0_i32, %c0_i32_0 : i32, i32
  }
  func.func @transform_4(%arg0: i32) -> (i32, i32) {
    %c0_i32 = arith.constant 0 : i32
    %c0_i32_0 = arith.constant 0 : i32
    %c0_i32_1 = arith.constant 0 : i32
    return %c0_i32, %c0_i32_0 : i32, i32
  }
  func.func @transform_5(%arg0: i32) -> (i32, i32) {
    %c0_i32 = arith.constant 0 : i32
    %c0_i32_0 = arith.constant 0 : i32
    %c0_i32_1 = arith.constant 0 : i32
    return %c0_i32, %c0_i32_0 : i32, i32
  }
  func.func @transform_6(%arg0: i32) -> (i32, i32) {
    %c0_i32 = arith.constant 0 : i32
    %c0_i32_0 = arith.constant 0 : i32
    %c0_i32_1 = arith.constant 0 : i32
    return %c0_i32, %c0_i32_0 : i32, i32
  }
  func.func @transform_7(%arg0: i32) -> (i32, i32) {
    %c0_i32 = arith.constant 0 : i32
    %c0_i32_0 = arith.constant 0 : i32
    return %arg0, %c0_i32 : i32, i32
  }
}

</mosaic_0001>

<llo_original>
// kernel: dqn_forward.1
$region0: #{dqn_forward.1}
  #allocation0 [shape = 'u32[]', space=smem, size = 0x4, offset = 0x4, fixed_abs, tag = 'smem constant byte address 0x4 - core index']
  #allocation1 [shape = 'u32[144,128]{1,0:T(1,128)}', space=vmem, size = 0x12000, scoped, tag = 'internal scratch']
  %s0 = inlined_call_operand.vmem [shape: bf16[8,128], index: 0, kind: input, shape index: {}]
  %s1 = inlined_call_operand.vmem [shape: bf16[128,256], index: 1, kind: input, shape index: {}]
  %s2 = inlined_call_operand.vmem [shape: f32[1,256], index: 2, kind: input, shape index: {}]
  %s3 = inlined_call_operand.vmem [shape: bf16[256,128], index: 3, kind: input, shape index: {}]
  %s4 = inlined_call_operand.vmem [shape: f32[1,128], index: 4, kind: input, shape index: {}]
  %s5 = inlined_call_operand.vmem [shape: bf16[128,128], index: 5, kind: input, shape index: {}]
  %s6 = inlined_call_operand.vmem [shape: f32[1,128], index: 6, kind: input, shape index: {}]
  %s7 = inlined_call_operand.vmem [shape: f32[8,128], index: 7, kind: output, shape index: {}]
  %s8 = sld [smem:[#allocation0]]
  $region38: #{dqn_forward.1} parent=0
    _
  %s10 = ssub.s32 1, %s8
  %s11 = scalar_select 0, %s10, %s8
  // Predicated region
  $region2: #{dqn_forward.1} parent=0 // pred_check
    _
  $region3: #{dqn_forward.1} parent=0 // pred_check_branch
    %13 = sbr.rel (0) target = $region5
  $region4: #{dqn_forward.1} parent=0 // pred_region
    _
  $region5: #{dqn_forward.1} parent=0 // pred_fallthru
    _
  // Predicated region
  $region6: #{dqn_forward.1} parent=0 // pred_check
    _
  $region7: #{dqn_forward.1} parent=0 // pred_check_branch
    %15 = sbr.rel (0) target = $region9
  $region8: #{dqn_forward.1} parent=0 // pred_region
    _
  $region9: #{dqn_forward.1} parent=0 // pred_fallthru
    _
  // Predicated region
  $region10: #{dqn_forward.1} parent=0 // pred_check
    _
  $region11: #{dqn_forward.1} parent=0 // pred_check_branch
    %17 = sbr.rel (0) target = $region13
  $region12: #{dqn_forward.1} parent=0 // pred_region
    _
  $region13: #{dqn_forward.1} parent=0 // pred_fallthru
    _
  // Predicated region
  $region14: #{dqn_forward.1} parent=0 // pred_check
    _
  $region15: #{dqn_forward.1} parent=0 // pred_check_branch
    %19 = sbr.rel (0) target = $region17
  $region16: #{dqn_forward.1} parent=0 // pred_region
    _
  $region17: #{dqn_forward.1} parent=0 // pred_fallthru
    _
  // Predicated region
  $region18: #{dqn_forward.1} parent=0 // pred_check
    _
  $region19: #{dqn_forward.1} parent=0 // pred_check_branch
    %21 = sbr.rel (0) target = $region21
  $region20: #{dqn_forward.1} parent=0 // pred_region
    _
  $region21: #{dqn_forward.1} parent=0 // pred_fallthru
    _
  // Predicated region
  $region22: #{dqn_forward.1} parent=0 // pred_check
    _
  $region23: #{dqn_forward.1} parent=0 // pred_check_branch
    %23 = sbr.rel (0) target = $region25
  $region24: #{dqn_forward.1} parent=0 // pred_region
    _
  $region25: #{dqn_forward.1} parent=0 // pred_fallthru
    _
  // Predicated region
  $region26: #{dqn_forward.1} parent=0 // pred_check
    _
  $region27: #{dqn_forward.1} parent=0 // pred_check_branch
    %25 = sbr.rel (0) target = $region29
  $region28: #{dqn_forward.1} parent=0 // pred_region
    _
  $region29: #{dqn_forward.1} parent=0 // pred_fallthru
    _
  %v27 = vld [vmem:[%s0] sm:$0xf]
  %v28 = vld [vmem:[%s1] sm:$0xff]
  %v29 = vld [vmem:[%s1 + $0x8] sm:$0xff]
  %v30 = vld [vmem:[%s1 + $0x10] sm:$0xff]
  %v31 = vld [vmem:[%s1 + $0x18] sm:$0xff]
  %v32 = vld [vmem:[%s1 + $0x20] sm:$0xff]
  %v33 = vld [vmem:[%s1 + $0x28] sm:$0xff]
  %v34 = vld [vmem:[%s1 + $0x30] sm:$0xff]
  %v35 = vld [vmem:[%s1 + $0x38] sm:$0xff]
  %v36 = vld [vmem:[%s1 + $0x40] sm:$0xff]
  %v37 = vld [vmem:[%s1 + $0x48] sm:$0xff]
  %v38 = vld [vmem:[%s1 + $0x50] sm:$0xff]
  %v39 = vld [vmem:[%s1 + $0x58] sm:$0xff]
  %v40 = vld [vmem:[%s1 + $0x60] sm:$0xff]
  %v41 = vld [vmem:[%s1 + $0x68] sm:$0xff]
  %v42 = vld [vmem:[%s1 + $0x70] sm:$0xff]
  %v43 = vld [vmem:[%s1 + $0x78] sm:$0xff]
  %v44 = vld [vmem:[%s2] sm:$0x3]
  %v46 = vlaneseq
  %v47 = vshrl.u32 %v46, 7
  %v48 = vsub.s32 0, %v47
  %v49 = vrot.slane %v44, %v48
  %v50 = vlaneseq
  %v51 = vshrl.u32 %v50, 7
  %v52 = vsub.s32 1, %v51
  %v53 = vrot.slane %v44, %v52
  %v72 = vunpack.c.l.b16 %v28
  %v73 = vunpack.c.h.b16 %v28
  %v74 = vunpack.c.l.b16 %v29
  %v75 = vunpack.c.h.b16 %v29
  %v76 = vunpack.c.l.b16 %v30
  %v77 = vunpack.c.h.b16 %v30
  %v78 = vunpack.c.l.b16 %v31
  %v79 = vunpack.c.h.b16 %v31
  %v80 = vunpack.c.l.b16 %v32
  %v81 = vunpack.c.h.b16 %v32
  %v82 = vunpack.c.l.b16 %v33
  %v83 = vunpack.c.h.b16 %v33
  %v84 = vunpack.c.l.b16 %v34
  %v85 = vunpack.c.h.b16 %v34
  %v86 = vunpack.c.l.b16 %v35
  %v87 = vunpack.c.h.b16 %v35
  %v88 = vunpack.c.l.b16 %v36
  %v89 = vunpack.c.h.b16 %v36
  %v90 = vunpack.c.l.b16 %v37
  %v91 = vunpack.c.h.b16 %v37
  %v92 = vunpack.c.l.b16 %v38
  %v93 = vunpack.c.h.b16 %v38
  %v94 = vunpack.c.l.b16 %v39
  %v95 = vunpack.c.h.b16 %v39
  %v96 = vunpack.c.l.b16 %v40
  %v97 = vunpack.c.h.b16 %v40
  %v98 = vunpack.c.l.b16 %v41
  %v99 = vunpack.c.h.b16 %v41
  %v100 = vunpack.c.l.b16 %v42
  %v101 = vunpack.c.h.b16 %v42
  %v102 = vunpack.c.l.b16 %v43
  %v103 = vunpack.c.h.b16 %v43
  %v104 = vpack.c.b16 %v74, %v72
  %v105 = vpack.c.b16 %v75, %v73
  %v106 = vpack.c.b16 %v78, %v76
  %v107 = vpack.c.b16 %v79, %v77
  %v108 = vpack.c.b16 %v82, %v80
  %v109 = vpack.c.b16 %v83, %v81
  %v110 = vpack.c.b16 %v86, %v84
  %v111 = vpack.c.b16 %v87, %v85
  %v112 = vpack.c.b16 %v90, %v88
  %v113 = vpack.c.b16 %v91, %v89
  %v114 = vpack.c.b16 %v94, %v92
  %v115 = vpack.c.b16 %v95, %v93
  %v116 = vpack.c.b16 %v98, %v96
  %v117 = vpack.c.b16 %v99, %v97
  %v118 = vpack.c.b16 %v102, %v100
  %v119 = vpack.c.b16 %v103, %v101
  %136 = vmatprep.subr.bf16.mxu0 %v105
  %137 = vmatpush1.bf16.msra.mxu0 %v104
  %138 = vmatprep.subr.bf16.mxu0 %v107
  %139 = vmatpush1.bf16.msra.mxu0 %v106
  %140 = vmatprep.subr.bf16.mxu0 %v109
  %141 = vmatpush1.bf16.msra.mxu0 %v108
  %142 = vmatprep.subr.bf16.mxu0 %v111
  %143 = vmatpush1.bf16.msra.mxu0 %v110
  %144 = vmatprep.subr.bf16.mxu0 %v113
  %145 = vmatpush1.bf16.msra.mxu0 %v112
  %146 = vmatprep.subr.bf16.mxu0 %v115
  %147 = vmatpush1.bf16.msra.mxu0 %v114
  %148 = vmatprep.subr.bf16.mxu0 %v117
  %149 = vmatpush1.bf16.msra.mxu0 %v116
  %150 = vmatprep.subr.bf16.mxu0 %v119
  %151 = vmatpush1.bf16.msra.mxu0 %v118
  %152 = vmatprep.subr.bf16.mxu0 0
  %153 = vmatpush1.bf16.msra.mxu0 0
  %154 = vmatprep.subr.bf16.mxu0 0
  %155 = vmatpush1.bf16.msra.mxu0 0
  %156 = vmatprep.subr.bf16.mxu0 0
  %157 = vmatpush1.bf16.msra.mxu0 0
  %158 = vmatprep.subr.bf16.mxu0 0
  %159 = vmatpush1.bf16.msra.mxu0 0
  %160 = vmatprep.subr.bf16.mxu0 0
  %161 = vmatpush1.bf16.msra.mxu0 0
  %162 = vmatprep.subr.bf16.mxu0 0
  %163 = vmatpush1.bf16.msra.mxu0 0
  %164 = vmatprep.subr.bf16.mxu0 0
  %165 = vmatpush1.bf16.msra.mxu0 0
  %166 = vmatprep.subr.bf16.mxu0 0
  %167 = vmatpush1.bf16.msra.mxu0 0
  %168 = vmatprep.mubr.bf16.mxu0 0
  %169 = vmatmul.mubr.bf16.gmra.mrb[0].mxu0 %v27
  %v170 = vpop.f32.mrb[0].mxu0
  %v171 = vadd.f32 %v49, %v170
  %v172 = vpop.f32.mrb[0].mxu0
  %v173 = vadd.f32 %v53, %v172
  %v174 = vpop.f32.mrb[0].mxu0
  %v175 = vpop.f32.mrb[0].mxu0
  %176 = vdwg.mxu0
  %v177 = vmax.f32 %v171, 0.0
  %v178 = vmax.f32 %v173, 0.0
  %v179 = vpack.c.bf16 %v177, %v177
  %v180 = vpack.c.bf16 %v178, %v178
  %v181 = vld [vmem:[%s3] sm:$0xf]
  %v182 = vld [vmem:[%s3 + $0x4] sm:$0xf]
  %v183 = vld [vmem:[%s3 + $0x8] sm:$0xf]
  %v184 = vld [vmem:[%s3 + $0xc] sm:$0xf]
  %v185 = vld [vmem:[%s3 + $0x10] sm:$0xf]
  %v186 = vld [vmem:[%s3 + $0x14] sm:$0xf]
  %v187 = vld [vmem:[%s3 + $0x18] sm:$0xf]
  %v188 = vld [vmem:[%s3 + $0x1c] sm:$0xf]
  %v189 = vld [vmem:[%s3 + $0x20] sm:$0xf]
  %v190 = vld [vmem:[%s3 + $0x24] sm:$0xf]
  %v191 = vld [vmem:[%s3 + $0x28] sm:$0xf]
  %v192 = vld [vmem:[%s3 + $0x2c] sm:$0xf]
  %v193 = vld [vmem:[%s3 + $0x30] sm:$0xf]
  %v194 = vld [vmem:[%s3 + $0x34] sm:$0xf]
  %v195 = vld [vmem:[%s3 + $0x38] sm:$0xf]
  %v196 = vld [vmem:[%s3 + $0x3c] sm:$0xf]
  %v197 = vld [vmem:[%s3 + $0x40] sm:$0xf]
  %v198 = vld [vmem:[%s3 + $0x44] sm:$0xf]
  %v199 = vld [vmem:[%s3 + $0x48] sm:$0xf]
  %v200 = vld [vmem:[%s3 + $0x4c] sm:$0xf]
  %v201 = vld [vmem:[%s3 + $0x50] sm:$0xf]
  %v202 = vld [vmem:[%s3 + $0x54] sm:$0xf]
  %v203 = vld [vmem:[%s3 + $0x58] sm:$0xf]
  %v204 = vld [vmem:[%s3 + $0x5c] sm:$0xf]
  %v205 = vld [vmem:[%s3 + $0x60] sm:$0xf]
  %v206 = vld [vmem:[%s3 + $0x64] sm:$0xf]
  %v207 = vld [vmem:[%s3 + $0x68] sm:$0xf]
  %v208 = vld [vmem:[%s3 + $0x6c] sm:$0xf]
  %v209 = vld [vmem:[%s3 + $0x70] sm:$0xf]
  %v210 = vld [vmem:[%s3 + $0x74] sm:$0xf]
  %v211 = vld [vmem:[%s3 + $0x78] sm:$0xf]
  %v212 = vld [vmem:[%s3 + $0x7c] sm:$0xf]
  %v213 = vld [vmem:[%s4] sm:$0x1]
  %v215 = vlaneseq
  %v216 = vshrl.u32 %v215, 7
  %v217 = vsub.s32 0, %v216
  %v218 = vrot.slane %v213, %v217
  %v252 = vunpack.c.l.b16 %v181
  %v253 = vunpack.c.l.b16 %v182
  %v254 = vunpack.c.l.b16 %v183
  %v255 = vunpack.c.l.b16 %v184
  %v256 = vunpack.c.l.b16 %v185
  %v257 = vunpack.c.l.b16 %v186
  %v258 = vunpack.c.l.b16 %v187
  %v259 = vunpack.c.l.b16 %v188
  %v260 = vunpack.c.l.b16 %v189
  %v261 = vunpack.c.l.b16 %v190
  %v262 = vunpack.c.l.b16 %v191
  %v263 = vunpack.c.l.b16 %v192
  %v264 = vunpack.c.l.b16 %v193
  %v265 = vunpack.c.l.b16 %v194
  %v266 = vunpack.c.l.b16 %v195
  %v267 = vunpack.c.l.b16 %v196
  %v268 = vunpack.c.l.b16 %v197
  %v269 = vunpack.c.l.b16 %v198
  %v270 = vunpack.c.l.b16 %v199
  %v271 = vunpack.c.l.b16 %v200
  %v272 = vunpack.c.l.b16 %v201
  %v273 = vunpack.c.l.b16 %v202
  %v274 = vunpack.c.l.b16 %v203
  %v275 = vunpack.c.l.b16 %v204
  %v276 = vunpack.c.l.b16 %v205
  %v277 = vunpack.c.l.b16 %v206
  %v278 = vunpack.c.l.b16 %v207
  %v279 = vunpack.c.l.b16 %v208
  %v280 = vunpack.c.l.b16 %v209
  %v281 = vunpack.c.l.b16 %v210
  %v282 = vunpack.c.l.b16 %v211
  %v283 = vunpack.c.l.b16 %v212
  %v284 = vpack.c.b16 %v253, %v252
  %v285 = vpack.c.b16 %v255, %v254
  %v286 = vpack.c.b16 %v257, %v256
  %v287 = vpack.c.b16 %v259, %v258
  %v288 = vpack.c.b16 %v261, %v260
  %v289 = vpack.c.b16 %v263, %v262
  %v290 = vpack.c.b16 %v265, %v264
  %v291 = vpack.c.b16 %v267, %v266
  %v292 = vpack.c.b16 %v269, %v268
  %v293 = vpack.c.b16 %v271, %v270
  %v294 = vpack.c.b16 %v273, %v272
  %v295 = vpack.c.b16 %v275, %v274
  %v296 = vpack.c.b16 %v277, %v276
  %v297 = vpack.c.b16 %v279, %v278
  %v298 = vpack.c.b16 %v281, %v280
  %v299 = vpack.c.b16 %v283, %v282
  %316 = vmatprep.subr.bf16.mxu0 0
  %317 = vmatpush1.bf16.msra.mxu0 %v284
  %318 = vmatprep.subr.bf16.mxu0 0
  %319 = vmatpush1.bf16.msra.mxu0 %v285
  %320 = vmatprep.subr.bf16.mxu0 0
  %321 = vmatpush1.bf16.msra.mxu0 %v286
  %322 = vmatprep.subr.bf16.mxu0 0
  %323 = vmatpush1.bf16.msra.mxu0 %v287
  %324 = vmatprep.subr.bf16.mxu0 0
  %325 = vmatpush1.bf16.msra.mxu0 %v288
  %326 = vmatprep.subr.bf16.mxu0 0
  %327 = vmatpush1.bf16.msra.mxu0 %v289
  %328 = vmatprep.subr.bf16.mxu0 0
  %329 = vmatpush1.bf16.msra.mxu0 %v290
  %330 = vmatprep.subr.bf16.mxu0 0
  %331 = vmatpush1.bf16.msra.mxu0 %v291
  %332 = vmatprep.subr.bf16.mxu0 0
  %333 = vmatpush1.bf16.msra.mxu0 %v292
  %334 = vmatprep.subr.bf16.mxu0 0
  %335 = vmatpush1.bf16.msra.mxu0 %v293
  %336 = vmatprep.subr.bf16.mxu0 0
  %337 = vmatpush1.bf16.msra.mxu0 %v294
  %338 = vmatprep.subr.bf16.mxu0 0
  %339 = vmatpush1.bf16.msra.mxu0 %v295
  %340 = vmatprep.subr.bf16.mxu0 0
  %341 = vmatpush1.bf16.msra.mxu0 %v296
  %342 = vmatprep.subr.bf16.mxu0 0
  %343 = vmatpush1.bf16.msra.mxu0 %v297
  %344 = vmatprep.subr.bf16.mxu0 0
  %345 = vmatpush1.bf16.msra.mxu0 %v298
  %346 = vmatprep.subr.bf16.mxu0 0
  %347 = vmatpush1.bf16.msra.mxu0 %v299
  %348 = vmatprep.mubr.bf16.mxu0 %v180
  %349 = vmatmul.mubr.bf16.gmra.mrb[0].mxu0 %v179
  %v350 = vpop.f32.mrb[0].mxu0
  %v351 = vadd.f32 %v218, %v350
  %v352 = vpop.f32.mrb[0].mxu0
  %v353 = vpop.f32.mrb[0].mxu0
  %v354 = vpop.f32.mrb[0].mxu0
  %355 = vdwg.mxu0
  %v356 = vmax.f32 %v351, 0.0
  %v357 = vpack.c.bf16 %v356, %v356
  %v358 = vld [vmem:[%s5] sm:$0xf]
  %v359 = vld [vmem:[%s5 + $0x4] sm:$0xf]
  %v360 = vld [vmem:[%s5 + $0x8] sm:$0xf]
  %v361 = vld [vmem:[%s5 + $0xc] sm:$0xf]
  %v362 = vld [vmem:[%s5 + $0x10] sm:$0xf]
  %v363 = vld [vmem:[%s5 + $0x14] sm:$0xf]
  %v364 = vld [vmem:[%s5 + $0x18] sm:$0xf]
  %v365 = vld [vmem:[%s5 + $0x1c] sm:$0xf]
  %v366 = vld [vmem:[%s5 + $0x20] sm:$0xf]
  %v367 = vld [vmem:[%s5 + $0x24] sm:$0xf]
  %v368 = vld [vmem:[%s5 + $0x28] sm:$0xf]
  %v369 = vld [vmem:[%s5 + $0x2c] sm:$0xf]
  %v370 = vld [vmem:[%s5 + $0x30] sm:$0xf]
  %v371 = vld [vmem:[%s5 + $0x34] sm:$0xf]
  %v372 = vld [vmem:[%s5 + $0x38] sm:$0xf]
  %v373 = vld [vmem:[%s5 + $0x3c] sm:$0xf]
  %v374 = vld [vmem:[%s6] sm:$0x1]
  %v376 = vlaneseq
  %v377 = vshrl.u32 %v376, 7
  %v378 = vsub.s32 0, %v377
  %v379 = vrot.slane %v374, %v378
  %v397 = vunpack.c.l.b16 %v358
  %v398 = vunpack.c.l.b16 %v359
  %v399 = vunpack.c.l.b16 %v360
  %v400 = vunpack.c.l.b16 %v361
  %v401 = vunpack.c.l.b16 %v362
  %v402 = vunpack.c.l.b16 %v363
  %v403 = vunpack.c.l.b16 %v364
  %v404 = vunpack.c.l.b16 %v365
  %v405 = vunpack.c.l.b16 %v366
  %v406 = vunpack.c.l.b16 %v367
  %v407 = vunpack.c.l.b16 %v368
  %v408 = vunpack.c.l.b16 %v369
  %v409 = vunpack.c.l.b16 %v370
  %v410 = vunpack.c.l.b16 %v371
  %v411 = vunpack.c.l.b16 %v372
  %v412 = vunpack.c.l.b16 %v373
  %v413 = vpack.c.b16 %v398, %v397
  %v414 = vpack.c.b16 %v400, %v399
  %v415 = vpack.c.b16 %v402, %v401
  %v416 = vpack.c.b16 %v404, %v403
  %v417 = vpack.c.b16 %v406, %v405
  %v418 = vpack.c.b16 %v408, %v407
  %v419 = vpack.c.b16 %v410, %v409
  %v420 = vpack.c.b16 %v412, %v411
  %429 = vmatprep.subr.bf16.mxu0 0
  %430 = vmatpush1.bf16.msra.mxu0 %v413
  %431 = vmatprep.subr.bf16.mxu0 0
  %432 = vmatpush1.bf16.msra.mxu0 %v414
  %433 = vmatprep.subr.bf16.mxu0 0
  %434 = vmatpush1.bf16.msra.mxu0 %v415
  %435 = vmatprep.subr.bf16.mxu0 0
  %436 = vmatpush1.bf16.msra.mxu0 %v416
  %437 = vmatprep.subr.bf16.mxu0 0
  %438 = vmatpush1.bf16.msra.mxu0 %v417
  %439 = vmatprep.subr.bf16.mxu0 0
  %440 = vmatpush1.bf16.msra.mxu0 %v418
  %441 = vmatprep.subr.bf16.mxu0 0
  %442 = vmatpush1.bf16.msra.mxu0 %v419
  %443 = vmatprep.subr.bf16.mxu0 0
  %444 = vmatpush1.bf16.msra.mxu0 %v420
  %445 = vmatprep.subr.bf16.mxu0 0
  %446 = vmatpush1.bf16.msra.mxu0 0
  %447 = vmatprep.subr.bf16.mxu0 0
  %448 = vmatpush1.bf16.msra.mxu0 0
  %449 = vmatprep.subr.bf16.mxu0 0
  %450 = vmatpush1.bf16.msra.mxu0 0
  %451 = vmatprep.subr.bf16.mxu0 0
  %452 = vmatpush1.bf16.msra.mxu0 0
  %453 = vmatprep.subr.bf16.mxu0 0
  %454 = vmatpush1.bf16.msra.mxu0 0
  %455 = vmatprep.subr.bf16.mxu0 0
  %456 = vmatpush1.bf16.msra.mxu0 0
  %457 = vmatprep.subr.bf16.mxu0 0
  %458 = vmatpush1.bf16.msra.mxu0 0
  %459 = vmatprep.subr.bf16.mxu0 0
  %460 = vmatpush1.bf16.msra.mxu0 0
  %461 = vmatprep.mubr.bf16.mxu0 0
  %462 = vmatmul.mubr.bf16.gmra.mrb[0].mxu0 %v357
  %v463 = vpop.f32.mrb[0].mxu0
  %v464 = vadd.f32 %v379, %v463
  %v465 = vpop.f32.mrb[0].mxu0
  %v466 = vpop.f32.mrb[0].mxu0
  %v467 = vpop.f32.mrb[0].mxu0
  %468 = vdwg.mxu0
  %469 = vst [vmem:[%s7] sm:$0xff] %v464
  // Predicated region
  $region30: #{dqn_forward.1} parent=0 // pred_check
    _
  $region31: #{dqn_forward.1} parent=0 // pred_check_branch
    %471 = sbr.rel (0) target = $region33
  $region32: #{dqn_forward.1} parent=0 // pred_region
    _
  $region33: #{dqn_forward.1} parent=0 // pred_fallthru
    _
  // Predicated region
  $region34: #{dqn_forward.1} parent=0 // pred_check
    _
  $region35: #{dqn_forward.1} parent=0 // pred_check_branch
    %473 = sbr.rel (0) target = $region37
  $region36: #{dqn_forward.1} parent=0 // pred_region
    _
  $region37: #{dqn_forward.1} parent=0 // pred_fallthru
    _

</llo_original>
